<compile_context>
chip_gen: v7x
topology: tpu7x:2x2x1
jax: 0.10.0
libtpu: 0.0.40
codegen_flags: <defaults>
</compile_context>

<pallas_src>
import jax
import jax.numpy as jnp
from jax.experimental import pallas as pl
from jax.experimental.pallas import tpu as pltpu


def _se_kernel(x_ref, w1t_ref, w2_ref, o_ref):
    # x_ref:   (Bt, C, HW)  NCHW-native block (HW on lanes, C on sublanes)
    # w1t_ref: (C, C_red)   == W1.T  (W1 is (C_red, C) in PyTorch)
    # w2_ref:  (C, C_red)   == W2    (W2 is (C, C_red) in PyTorch)
    # o_ref:   (Bt, C, HW)
    xs = x_ref[...]
    inv_hw = 1.0 / x_ref.shape[-1]          # static constant; no in-kernel divide

    # Squeeze: global average pool = lane-axis sum (fp32 accumulate) * 1/HW.
    pooled = jnp.sum(xs, axis=-1, keepdims=True, dtype=jnp.float32) * inv_hw   # (Bt, C, 1)

    # Excite: Linear -> ReLU -> Linear -> Sigmoid on the VPU/XLU/EUP.
    # (1 x C x C_red matmuls are degenerate MXU shapes, so keep them off the MXU.)
    w1t = w1t_ref[...].astype(jnp.float32)                                     # (C, C_red)
    w2 = w2_ref[...].astype(jnp.float32)                                       # (C, C_red)
    z = jnp.sum(pooled * w1t[None, :, :], axis=1, keepdims=True)               # (Bt, 1, C_red)
    z = jnp.maximum(z, 0.0)
    y = jax.nn.sigmoid(jnp.sum(z * w2[None, :, :], axis=-1, keepdims=True))    # (Bt, C, 1)

    # Scale: per-channel gate broadcast along the lane (spatial) axis,
    # in the source dtype (no second full-size fp32 temp).
    o_ref[...] = (xs * y.astype(xs.dtype)).astype(o_ref.dtype)


def se_block(x_nchw, w1, w2):
    """x_nchw: (B, C, H, W); w1: (C_red, C); w2: (C, C_red). Returns (B, C, H, W)."""
    B, C, H, W = x_nchw.shape
    HW = H * W
    C_red = w1.shape[0]

    x = x_nchw.reshape(B, C, HW)          # free: only merges trailing dims
    w1t = jnp.transpose(w1)               # (C, C_red) — tiny weight, negligible traffic

    # Batch-block size: big enough to amortize the ~0.35us per-grid-step cost,
    # but keep >= 2 parallel grid steps (v7x has 2 TensorCores) when B allows.
    itemsize = jnp.dtype(x_nchw.dtype).itemsize
    per_batch_bytes = C * HW * itemsize
    target_block_bytes = 2 << 20
    bt = max(1, min(B, target_block_bytes // max(per_batch_bytes, 1)))
    if B >= 2:
        bt = min(bt, max(1, B // 2))
    while B % bt:
        bt -= 1
    grid = (B // bt,)

    # Explicit VMEM budget: double-buffered in + out blocks, weights, headroom;
    # capped to a safe fraction of this device's VMEM (v7x has only 64 MiB/TC).
    block_bytes = bt * per_batch_bytes
    needed = 4 * block_bytes + 2 * C * C_red * 4 + (4 << 20)
    vmem_cap = 64 << 20
    try:
        vmem_cap = int(pltpu.get_tpu_info().vmem_capacity_bytes)
    except Exception:
        pass
    vmem_limit = int(min(max(needed, 16 << 20), (vmem_cap * 3) // 4))
    # TODO(synk): if a single batch element (C*HW) no longer fits VMEM (v7x:
    # 64 MiB/TC), switch to a two-pass tiled scheme (pool pass over an HW grid
    # axis marked 'arbitrary', then a scale pass) instead of this fused kernel.

    out = pl.pallas_call(
        _se_kernel,
        out_shape=jax.ShapeDtypeStruct((B, C, HW), x_nchw.dtype),
        grid_spec=pltpu.PrefetchScalarGridSpec(
            num_scalar_prefetch=0,
            grid=grid,
            in_specs=[
                pl.BlockSpec((bt, C, HW), lambda b: (b, 0, 0)),
                pl.BlockSpec((C, C_red), lambda b: (0, 0)),
                pl.BlockSpec((C, C_red), lambda b: (0, 0)),
            ],
            out_specs=pl.BlockSpec((bt, C, HW), lambda b: (b, 0, 0)),
        ),
        compiler_params=pltpu.CompilerParams(
            dimension_semantics=("parallel",),
            vmem_limit_bytes=vmem_limit),
    )(x, w1t, w2)

    return out.reshape(B, C, H, W)


def se_block_reference(x_nchw, w1, w2):
    """Pure-JAX reference mirroring the PyTorch forward."""
    y = jnp.mean(x_nchw.astype(jnp.float32), axis=(2, 3))          # (B, C)
    y = jnp.maximum(y @ w1.T.astype(jnp.float32), 0.0)             # (B, C_red)
    y = jax.nn.sigmoid(y @ w2.T.astype(jnp.float32))               # (B, C)
    return (x_nchw.astype(jnp.float32) * y[:, :, None, None]).astype(x_nchw.dtype)


if __name__ == "__main__":
    # Shapes consistent with SEBlock(channel=32, reduction=16):
    #   x: (B=2, C=32, H=16, W=16), W1: (2, 32), W2: (32, 2)
    B, C, H, W = 2, 32, 16, 16
    reduction = 16
    C_red = C // reduction

    key = jax.random.PRNGKey(0)
    kx, k1, k2 = jax.random.split(key, 3)
    x = jax.random.normal(kx, (B, C, H, W), dtype=jnp.float32)
    # Deterministic Linear-weight init (uniform, bound = 1/sqrt(fan_in)).
    w1 = jax.random.uniform(k1, (C_red, C), jnp.float32,
                            minval=-1.0 / (C ** 0.5), maxval=1.0 / (C ** 0.5))
    w2 = jax.random.uniform(k2, (C, C_red), jnp.float32,
                            minval=-1.0 / (C_red ** 0.5), maxval=1.0 / (C_red ** 0.5))

    out = jax.block_until_ready(se_block(x, w1, w2))
    ref = jax.block_until_ready(se_block_reference(x, w1, w2))

    assert out.shape == (B, C, H, W)
    assert jnp.allclose(out, ref, atol=1e-5, rtol=1e-5), "mismatch vs reference"
    print("KERNEL_OK")
</pallas_src>

<mosaic_0001>
module attributes {stable_mosaic.version = 11 : i64} {
  func.func @_se_kernel(%arg0: i32, %arg1: memref<1x32x256xf32, #tpu.memory_space<vmem>>, %arg2: memref<32x2xf32, #tpu.memory_space<vmem>>, %arg3: memref<32x2xf32, #tpu.memory_space<vmem>>, %arg4: memref<1x32x256xf32, #tpu.memory_space<vmem>>) attributes {dimension_semantics = [#tpu.dimension_semantics<parallel>], iteration_bounds = array<i64: 2>, scalar_prefetch = 0 : i64, scratch_operands = 0 : i64, tpu.core_type = #tpu.core_type<tc>, window_params = [{transform_indices = @transform_0, window_bounds = array<i64: 1, 32, 256>}, {pipeline_mode = #tpu.pipeline_mode<synchronous>, transform_indices = @transform_1, window_bounds = array<i64: 32, 2>}, {pipeline_mode = #tpu.pipeline_mode<synchronous>, transform_indices = @transform_2, window_bounds = array<i64: 32, 2>}, {transform_indices = @transform_3, window_bounds = array<i64: 1, 32, 256>}]} {
    %c0 = arith.constant 0 : index
    %c0_0 = arith.constant 0 : index
    %c0_1 = arith.constant 0 : index
    %0 = vector.load %arg1[%c0, %c0_0, %c0_1] : memref<1x32x256xf32, #tpu.memory_space<vmem>>, vector<1x32x256xf32>
    %cst = arith.constant dense<0.000000e+00> : vector<1x32xf32>
    %1 = vector.multi_reduction <add>, %0, %cst [2] : vector<1x32x256xf32> to vector<1x32xf32>
    %2 = vector.shape_cast %1 : vector<1x32xf32> to vector<1x32x1xf32>
    %cst_2 = arith.constant 3.906250e-03 : f32
    %3 = vector.broadcast %cst_2 : f32 to vector<1x32x1xf32>
    %4 = arith.mulf %2, %3 : vector<1x32x1xf32>
    %c0_3 = arith.constant 0 : index
    %c0_4 = arith.constant 0 : index
    %5 = vector.load %arg2[%c0_3, %c0_4] : memref<32x2xf32, #tpu.memory_space<vmem>>, vector<32x2xf32>
    %c0_5 = arith.constant 0 : index
    %c0_6 = arith.constant 0 : index
    %6 = vector.load %arg3[%c0_5, %c0_6] : memref<32x2xf32, #tpu.memory_space<vmem>>, vector<32x2xf32>
    %7 = vector.shape_cast %5 : vector<32x2xf32> to vector<1x32x2xf32>
    %8 = vector.broadcast %4 : vector<1x32x1xf32> to vector<1x32x2xf32>
    %9 = arith.mulf %8, %7 : vector<1x32x2xf32>
    %cst_7 = arith.constant dense<0.000000e+00> : vector<1x2xf32>
    %10 = vector.multi_reduction <add>, %9, %cst_7 [1] : vector<1x32x2xf32> to vector<1x2xf32>
    %11 = vector.shape_cast %10 : vector<1x2xf32> to vector<1x1x2xf32>
    %cst_8 = arith.constant 0.000000e+00 : f32
    %12 = vector.broadcast %cst_8 : f32 to vector<1x1x2xf32>
    %13 = arith.maximumf %11, %12 : vector<1x1x2xf32>
    %14 = vector.shape_cast %6 : vector<32x2xf32> to vector<1x32x2xf32>
    %15 = vector.broadcast %13 : vector<1x1x2xf32> to vector<1x32x2xf32>
    %16 = arith.mulf %15, %14 : vector<1x32x2xf32>
    %cst_9 = arith.constant dense<0.000000e+00> : vector<1x32xf32>
    %17 = vector.multi_reduction <add>, %16, %cst_9 [2] : vector<1x32x2xf32> to vector<1x32xf32>
    %18 = vector.shape_cast %17 : vector<1x32xf32> to vector<1x32x1xf32>
    %19 = arith.negf %18 : vector<1x32x1xf32>
    %20 = math.exp %19 : vector<1x32x1xf32>
    %cst_10 = arith.constant 1.000000e+00 : f32
    %21 = vector.broadcast %cst_10 : f32 to vector<1x32x1xf32>
    %22 = arith.addf %21, %20 : vector<1x32x1xf32>
    %23 = arith.divf %21, %22 : vector<1x32x1xf32>
    %24 = vector.broadcast %23 : vector<1x32x1xf32> to vector<1x32x256xf32>
    %25 = arith.mulf %0, %24 : vector<1x32x256xf32>
    %c0_11 = arith.constant 0 : index
    %c0_12 = arith.constant 0 : index
    %c0_13 = arith.constant 0 : index
    %26 = vector.load %arg4[%c0_11, %c0_12, %c0_13] : memref<1x32x256xf32, #tpu.memory_space<vmem>>, vector<1x32x256xf32>
    tpu.vector_store %arg4[%c0_11, %c0_12, %c0_13], %25 {strides = array<i32>} : memref<1x32x256xf32, #tpu.memory_space<vmem>>, vector<1x32x256xf32>,
    return
  }
  func.func @transform_0(%arg0: i32) -> (i32, i32, i32) {
    %c0_i32 = arith.constant 0 : i32
    %c0_i32_0 = arith.constant 0 : i32
    %c0_i32_1 = arith.constant 0 : i32
    return %arg0, %c0_i32, %c0_i32_0 : i32, i32, i32
  }
  func.func @transform_1(%arg0: i32) -> (i32, i32) {
    %c0_i32 = arith.constant 0 : i32
    %c0_i32_0 = arith.constant 0 : i32
    %c0_i32_1 = arith.constant 0 : i32
    return %c0_i32, %c0_i32_0 : i32, i32
  }
  func.func @transform_2(%arg0: i32) -> (i32, i32) {
    %c0_i32 = arith.constant 0 : i32
    %c0_i32_0 = arith.constant 0 : i32
    %c0_i32_1 = arith.constant 0 : i32
    return %c0_i32, %c0_i32_0 : i32, i32
  }
  func.func @transform_3(%arg0: i32) -> (i32, i32, i32) {
    %c0_i32 = arith.constant 0 : i32
    %c0_i32_0 = arith.constant 0 : i32
    %c0_i32_1 = arith.constant 0 : i32
    return %arg0, %c0_i32, %c0_i32_0 : i32, i32, i32
  }
}

</mosaic_0001>

<llo_original>
// kernel: tpu_custom_call.1
$region0: #{tpu_custom_call.1}
  #allocation0 [shape = 'u32[]', space=smem, size = 0x4, offset = 0x4, fixed_abs, tag = 'smem constant byte address 0x4 - core index']
  #allocation1 [shape = 'u32[144,128]{1,0:T(1,128)}', space=vmem, size = 0x12000, scoped, tag = 'internal scratch']
  %s0 = inlined_call_operand.hbm [shape: f32[2,32,256], index: 0, kind: input, shape index: {}]
  %s1 = inlined_call_operand.vmem [shape: f32[32,2], index: 1, kind: input, shape index: {}]
  %s2 = inlined_call_operand.vmem [shape: f32[32,2], index: 2, kind: input, shape index: {}]
  %s3 = inlined_call_operand.hbm [shape: f32[2,32,256], index: 3, kind: output, shape index: {}]
  %s4 = sld [smem:[#allocation0]]
  $region49: #{tpu_custom_call.1} parent=0
    _
  %s6 = ssub.s32 1, %s4
  %s7 = scalar_select 0, %s6, %s4
  $region1: #{tpu_custom_call.1} parent=0
    #allocation2 [shape = 'u8[65536]{0}', space=vmem, size = 0x10000, scoped, tag = 'input window, operand 0']
    #allocation3 [shape = 's32[2]{0}', space=sflag, size = 0x8, scoped, tag = 'scoped memory for tpu_custom_call.1']
    #allocation4 [shape = 's32[2]{0}', space=sflag, size = 0x8, scoped, tag = 'scoped memory for tpu_custom_call.1']
    #allocation5 [shape = 'u8[65536]{0}', space=vmem, size = 0x10000, scoped, tag = 'output window, operand 0']
    %8 = vsyncpa [#allocation3], 0
    %s9 = scalar_lea.sflag [#allocation3], 1
    %10 = vsyncpa %s9, 0
    %11 = vsyncpa [#allocation4], 0
    %s12 = scalar_lea.sflag [#allocation4], 1
    %13 = vsyncpa %s12, 0
    loop: start=0, step=1, limit=4
    $region2: #{tpu_custom_call.1} parent=1 // loop_pre_header
      _
    $region3: #{tpu_custom_call.1} parent=1 // loop_header
      %s15 = sphi 0, %s19
      %p16 = scmp.ge.s32.totalorder %s15, 4
      %s25 = sphi 0, %s27
      %s28 = sphi 0, %s25
      %s29 = sphi 0, %s28
      %s45 = sphi 0, %s29
      %s49 = sphi 0, %s49
      %s51 = sphi 0, %s49
      %s52 = sphi 0, %s51
      %s66 = sphi 0, %s52
      %s70 = sphi 0, %s70
      %s72 = sphi 0, %s70
      %s73 = sphi 0, %s72
      %s87 = sphi 0, %s73
      %s93 = sphi 0, %s95
      %s96 = sphi 0, %s93
      %s97 = sphi 0, %s96
      %s113 = sphi 0, %s97
    $region4: #{tpu_custom_call.1} parent=1 // loop_header_branch
      %18 = sbr.rel (%p16) target = $region8
    $region5: #{tpu_custom_call.1} parent=1 // loop_body
      %s20 = ssub.s32 %s15, 1
      %s21 = ssub.s32 %s15, 2
      %s22 = sadd.s32 %s15, 1
      %s23 = ssub.s32 %s15, %s22
      %p24 = scmp.eq.s32.totalorder %s23, 0
      %s26 = sadd.s32 %s25, 1
      %s27 = scalar_select %p24, %s25, %s26
      %p30 = pneg %p24
      %p31 = scmp.eq.s32.totalorder %s15, 1
      %p32 = por %p30, %p31
      %p33 = scmp.ne.s32.totalorder %s25, %s28
      %p34 = scmp.eq.s32.totalorder %s15, 0
      %p35 = por %p33, %p34
      %p36 = scmp.ne.s32.totalorder %s25, %s28
      %p37 = scmp.eq.s32.totalorder %s20, 1
      %p38 = por %p36, %p37
      %p39 = scmp.ne.s32.totalorder %s28, %s29
      %p40 = scmp.eq.s32.totalorder %s20, 0
      %p41 = por %p39, %p40
      %p42 = scmp.ne.s32.totalorder %s28, %s29
      %p43 = scmp.eq.s32.totalorder %s21, 1
      %p44 = por %p42, %p43
      %p46 = scmp.ne.s32.totalorder %s29, %s45
      %p47 = scmp.eq.s32.totalorder %s21, 0
      %p48 = por %p46, %p47
      %s50 = sadd.s32 %s49, 1
      %p53 = scmp.eq.s32.totalorder %s15, 1
      %p54 = scmp.ne.s32.totalorder %s49, %s51
      %p55 = scmp.eq.s32.totalorder %s15, 0
      %p56 = por %p54, %p55
      %p57 = scmp.ne.s32.totalorder %s49, %s51
      %p58 = scmp.eq.s32.totalorder %s20, 1
      %p59 = por %p57, %p58
      %p60 = scmp.ne.s32.totalorder %s51, %s52
      %p61 = scmp.eq.s32.totalorder %s20, 0
      %p62 = por %p60, %p61
      %p63 = scmp.ne.s32.totalorder %s51, %s52
      %p64 = scmp.eq.s32.totalorder %s21, 1
      %p65 = por %p63, %p64
      %p67 = scmp.ne.s32.totalorder %s52, %s66
      %p68 = scmp.eq.s32.totalorder %s21, 0
      %p69 = por %p67, %p68
      %s71 = sadd.s32 %s70, 1
      %p74 = scmp.eq.s32.totalorder %s15, 1
      %p75 = scmp.ne.s32.totalorder %s70, %s72
      %p76 = scmp.eq.s32.totalorder %s15, 0
      %p77 = por %p75, %p76
      %p78 = scmp.ne.s32.totalorder %s70, %s72
      %p79 = scmp.eq.s32.totalorder %s20, 1
      %p80 = por %p78, %p79
      %p81 = scmp.ne.s32.totalorder %s72, %s73
      %p82 = scmp.eq.s32.totalorder %s20, 0
      %p83 = por %p81, %p82
      %p84 = scmp.ne.s32.totalorder %s72, %s73
      %p85 = scmp.eq.s32.totalorder %s21, 1
      %p86 = por %p84, %p85
      %p88 = scmp.ne.s32.totalorder %s73, %s87
      %p89 = scmp.eq.s32.totalorder %s21, 0
      %p90 = por %p88, %p89
      %s91 = ssub.s32 %s15, %s22
      %p92 = scmp.eq.s32.totalorder %s91, 0
      %s94 = sadd.s32 %s93, 1
      %s95 = scalar_select %p92, %s93, %s94
      %p98 = pneg %p92
      %p99 = scmp.eq.s32.totalorder %s15, 1
      %p100 = por %p98, %p99
      %p101 = scmp.ne.s32.totalorder %s93, %s96
      %p102 = scmp.eq.s32.totalorder %s15, 0
      %p103 = por %p101, %p102
      %p104 = scmp.ne.s32.totalorder %s93, %s96
      %p105 = scmp.eq.s32.totalorder %s20, 1
      %p106 = por %p104, %p105
      %p107 = scmp.ne.s32.totalorder %s96, %s97
      %p108 = scmp.eq.s32.totalorder %s20, 0
      %p109 = por %p107, %p108
      %p110 = scmp.ne.s32.totalorder %s96, %s97
      %p111 = scmp.eq.s32.totalorder %s21, 1
      %p112 = por %p110, %p111
      %p114 = scmp.ne.s32.totalorder %s97, %s113
      %p115 = scmp.eq.s32.totalorder %s21, 0
      %p116 = por %p114, %p115
      %p117 = scmp.le.s32.totalorder 1, %s15
      %p118 = scmp.lt.s32.totalorder %s15, 3
      %p119 = pnand %p117, %p118
      %p120 = pneg %p119
      // Predicated region
      $region9: #{tpu_custom_call.1} parent=5 // pred_check
        _
      $region10: #{tpu_custom_call.1} parent=5 // pred_check_branch
        %122 = sbr.rel (%p119) target = $region12
      $region11: #{tpu_custom_call.1} parent=5 // pred_region
        %s123 = ssub.s32 %s15, 1
        // Predicated region
        $region13: #{tpu_custom_call.1} parent=11 // pred_check
          %p124 = pneg %p62
        $region14: #{tpu_custom_call.1} parent=11 // pred_check_branch
          %126 = sbr.rel (%p124) target = $region16
        $region15: #{tpu_custom_call.1} parent=11 // pred_region
          _
        $region16: #{tpu_custom_call.1} parent=11 // pred_fallthru
          _
        // Predicated region
        $region17: #{tpu_custom_call.1} parent=11 // pred_check
          %p127 = pneg %p83
        $region18: #{tpu_custom_call.1} parent=11 // pred_check_branch
          %129 = sbr.rel (%p127) target = $region20
        $region19: #{tpu_custom_call.1} parent=11 // pred_region
          _
        $region20: #{tpu_custom_call.1} parent=11 // pred_fallthru
          _
      $region12: #{tpu_custom_call.1} parent=5 // pred_fallthru
        _
      %p130 = scmp.lt.s32.totalorder %s15, 2
      // Predicated region
      $region21: #{tpu_custom_call.1} parent=5 // pred_check
        %p131 = pneg %p130
      $region22: #{tpu_custom_call.1} parent=5 // pred_check_branch
        %133 = sbr.rel (%p131) target = $region24
      $region23: #{tpu_custom_call.1} parent=5 // pred_region
        // Predicated region
        $region25: #{tpu_custom_call.1} parent=23 // pred_check
          %p134 = pneg %p35
        $region26: #{tpu_custom_call.1} parent=23 // pred_check_branch
          %136 = sbr.rel (%p134) target = $region28
        $region27: #{tpu_custom_call.1} parent=23 // pred_region
          %s137 = sand.u32 %s25, 1
          %s138 = scalar_lea.sflag [#allocation3], %s137
          %s139 = sand.u32 %s25, 1
          %s140 = smul.addr %s139, 64
          %s141 = scalar_lea.vmem [#allocation2], %s140
          %s143 = ssub.s32 1024, 1024
          %144 = vsyncadd %s138, %s143
          %s145 = smul.addr %s15, 8
          %s146 = smul.addr %s145, 128
          %s147 = scalar_lea.hbm %s0, %s146
          %s148 = sshll.u32 %s141, 4
          %s149 = int_to_ptr.vmem [resolvable:$true] %s148
          %154 = dma.hbm_to_vmem [thread:$0]  %s147, 1024, %s149, %s138, 256, 256, 16
        $region28: #{tpu_custom_call.1} parent=23 // pred_fallthru
          _
      $region24: #{tpu_custom_call.1} parent=5 // pred_fallthru
        _
      %p155 = scmp.le.s32.totalorder 1, %s15
      %p156 = scmp.lt.s32.totalorder %s15, 3
      %p157 = pnand %p155, %p156
      %p158 = pneg %p157
      // Predicated region
      $region29: #{tpu_custom_call.1} parent=5 // pred_check
        _
      $region30: #{tpu_custom_call.1} parent=5 // pred_check_branch
        %160 = sbr.rel (%p157) target = $region32
      $region31: #{tpu_custom_call.1} parent=5 // pred_region
        %s161 = ssub.s32 %s15, 1
        %s162 = sand.u32 %s28, 1
        %s163 = scalar_lea.sflag [#allocation3], %s162
        %s164 = sand.u32 %s28, 1
        %s165 = smul.addr %s164, 64
        %s166 = scalar_lea.vmem [#allocation2], %s165
        // Predicated region
        $region33: #{tpu_custom_call.1} parent=31 // pred_check
          %p167 = pneg %p41
        $region34: #{tpu_custom_call.1} parent=31 // pred_check_branch
          %169 = sbr.rel (%p167) target = $region36
        $region35: #{tpu_custom_call.1} parent=31 // pred_region
          %170 = dma.done %s163, 1024
        $region36: #{tpu_custom_call.1} parent=31 // pred_fallthru
          _
        %s171 = sand.u32 %s28, 1
        %s172 = scalar_lea.sflag [#allocation3], %s171
        %s173 = sand.u32 %s28, 1
        %s174 = smul.addr %s173, 64
        %s175 = scalar_lea.vmem [#allocation2], %s174
        %p176 = pneg %p41
        %p177 = pneg %p38
        %p178 = pneg %p62
        %p179 = pneg %p59
        %p180 = pneg %p83
        %p181 = pneg %p80
        %p182 = pneg %p109
        %p183 = pneg %p106
        %s184 = sand.u32 %s96, 1
        %s185 = scalar_lea.sflag [#allocation4], %s184
        %s186 = sand.u32 %s96, 1
        %s187 = smul.addr %s186, 64
        %s188 = scalar_lea.vmem [#allocation5], %s187
        %v189 = vld [vmem:[%s166] sm:$0xff]
        %v190 = vld [vmem:[%s166 + $0x8] sm:$0xff]
        %v191 = vld [vmem:[%s166 + $0x10] sm:$0xff]
        %v192 = vld [vmem:[%s166 + $0x18] sm:$0xff]
        %v193 = vld [vmem:[%s166 + $0x20] sm:$0xff]
        %v194 = vld [vmem:[%s166 + $0x28] sm:$0xff]
        %v195 = vld [vmem:[%s166 + $0x30] sm:$0xff]
        %v196 = vld [vmem:[%s166 + $0x38] sm:$0xff]
        %v197 = vadd.f32 %v189, %v190
        %198 = vadd.xlane.f32.xlu0 %v197
        %v199 = vpop.xlane.xlu0 %198
        %v200 = vadd.f32 %v191, %v192
        %201 = vadd.xlane.f32.xlu0 %v200
        %v202 = vpop.xlane.xlu0 %201
        %v203 = vadd.f32 %v193, %v194
        %204 = vadd.xlane.f32.xlu0 %v203
        %v205 = vpop.xlane.xlu0 %204
        %v206 = vadd.f32 %v195, %v196
        %207 = vadd.xlane.f32.xlu0 %v206
        %v208 = vpop.xlane.xlu0 %207
        %v209 = vmul.f32 %v199, 0.00390625
        %v210 = vmul.f32 %v202, 0.00390625
        %v211 = vmul.f32 %v205, 0.00390625
        %v212 = vmul.f32 %v208, 0.00390625
        %v213 = vld [vmem:[%s1] sm:$0xff]
        %v214 = vld [vmem:[%s1 + $0x8] sm:$0xff]
        %v215 = vld [vmem:[%s1 + $0x10] sm:$0xff]
        %v216 = vld [vmem:[%s1 + $0x18] sm:$0xff]
        %v217 = vld [vmem:[%s2] sm:$0xff]
        %v218 = vld [vmem:[%s2 + $0x8] sm:$0xff]
        %v219 = vld [vmem:[%s2 + $0x10] sm:$0xff]
        %v220 = vld [vmem:[%s2 + $0x18] sm:$0xff]
        %v221 = vmul.f32 %v209, %v213
        %v222 = vmul.f32 %v210, %v214
        %v223 = vmul.f32 %v211, %v215
        %v224 = vmul.f32 %v212, %v216
        %vm225 = vcmask 15360
        %v226 = vsel %vm225, %v221, 0.0
        %v227 = vsel %vm225, %v222, 0.0
        %v228 = vadd.f32 %v226, %v227
        %v229 = vsel %vm225, %v223, 0.0
        %v230 = vadd.f32 %v228, %v229
        %v231 = vsel %vm225, %v224, 0.0
        %v232 = vadd.f32 %v230, %v231
        %v233 = vrot.slane %v232, 4
        %v234 = vadd.f32 %v232, %v233
        %v235 = vrot.slane %v234, 2
        %v236 = vadd.f32 %v234, %v235
        %v237 = vrot.slane %v236, 1
        %v238 = vadd.f32 %v236, %v237
        %v239 = vmax.f32 %v238, 0.0
        %v240 = vmul.f32 %v239, %v217
        %v241 = vmul.f32 %v239, %v218
        %v242 = vmul.f32 %v239, %v219
        %v243 = vmul.f32 %v239, %v220
        %v244 = vsel %vm225, %v240, 0.0
        %245 = vadd.xlane.f32.xlu0 %v244
        %v246 = vpop.xlane.xlu0 %245
        %v247 = vsel %vm225, %v241, 0.0
        %248 = vadd.xlane.f32.xlu0 %v247
        %v249 = vpop.xlane.xlu0 %248
        %v250 = vsel %vm225, %v242, 0.0
        %251 = vadd.xlane.f32.xlu0 %v250
        %v252 = vpop.xlane.xlu0 %251
        %v253 = vsel %vm225, %v243, 0.0
        %254 = vadd.xlane.f32.xlu0 %v253
        %v255 = vpop.xlane.xlu0 %254
        %v256 = vxor.u32 %v246, 2147483648
        %v257 = vxor.u32 %v249, 2147483648
        %v258 = vxor.u32 %v252, 2147483648
        %v259 = vxor.u32 %v255, 2147483648
        %v260 = vmul.f32 %v256, 1.442695
        %v261 = vpow.pop %v260
        %v262 = vmul.f32 %v257, 1.442695
        %v263 = vpow.pop %v262
        %v264 = vmul.f32 %v258, 1.442695
        %v265 = vpow.pop %v264
        %v266 = vmul.f32 %v259, 1.442695
        %v267 = vpow.pop %v266
        %v268 = vadd.f32 %v261, 1.0
        %v269 = vadd.f32 %v263, 1.0
        %v270 = vadd.f32 %v265, 1.0
        %v271 = vadd.f32 %v267, 1.0
        %v272 = vrcp.pop %v268
        %v273 = vmul.f32 1.0, %v272
        %v274 = vrcp.pop %v269
        %v275 = vmul.f32 1.0, %v274
        %v276 = vrcp.pop %v270
        %v277 = vmul.f32 1.0, %v276
        %v278 = vrcp.pop %v271
        %v279 = vmul.f32 1.0, %v278
        %v280 = vmul.f32 %v189, %v273
        %v281 = vmul.f32 %v190, %v273
        %v282 = vmul.f32 %v191, %v275
        %v283 = vmul.f32 %v192, %v275
        %v284 = vmul.f32 %v193, %v277
        %v285 = vmul.f32 %v194, %v277
        %v286 = vmul.f32 %v195, %v279
        %v287 = vmul.f32 %v196, %v279
        %288 = vst [vmem:[%s188] sm:$0xff] %v280
        %289 = vst [vmem:[%s188 + $0x8] sm:$0xff] %v281
        %290 = vst [vmem:[%s188 + $0x10] sm:$0xff] %v282
        %291 = vst [vmem:[%s188 + $0x18] sm:$0xff] %v283
        %292 = vst [vmem:[%s188 + $0x20] sm:$0xff] %v284
        %293 = vst [vmem:[%s188 + $0x28] sm:$0xff] %v285
        %294 = vst [vmem:[%s188 + $0x30] sm:$0xff] %v286
        %295 = vst [vmem:[%s188 + $0x38] sm:$0xff] %v287
        %s296 = sand.u32 %s96, 1
        %s297 = scalar_lea.sflag [#allocation4], %s296
        %s298 = sand.u32 %s96, 1
        %s299 = smul.addr %s298, 64
        %s300 = scalar_lea.vmem [#allocation5], %s299
        // Predicated region
        $region37: #{tpu_custom_call.1} parent=31 // pred_check
          %p301 = pneg %p106
        $region38: #{tpu_custom_call.1} parent=31 // pred_check_branch
          %303 = sbr.rel (%p301) target = $region40
        $region39: #{tpu_custom_call.1} parent=31 // pred_region
          %s305 = ssub.s32 1024, 1024
          %306 = vsyncadd %s297, %s305
          %s307 = smul.addr %s20, 8
          %s308 = smul.addr %s307, 128
          %s309 = scalar_lea.hbm %s3, %s308
          %s310 = sshll.u32 %s300, 4
          %s311 = int_to_ptr.vmem [resolvable:$true] %s310
          %316 = dma.vmem_to_hbm [thread:$0]  %s311, 1024, %s309, %s297, 256, 256, 16
        $region40: #{tpu_custom_call.1} parent=31 // pred_fallthru
          _
      $region32: #{tpu_custom_call.1} parent=5 // pred_fallthru
        _
      %p317 = scmp.le.s32.totalorder 2, %s15
      // Predicated region
      $region41: #{tpu_custom_call.1} parent=5 // pred_check
        %p318 = pneg %p317
      $region42: #{tpu_custom_call.1} parent=5 // pred_check_branch
        %320 = sbr.rel (%p318) target = $region44
      $region43: #{tpu_custom_call.1} parent=5 // pred_region
        %s321 = ssub.s32 %s15, 2
        // Predicated region
        $region45: #{tpu_custom_call.1} parent=43 // pred_check
          %p322 = pneg %p112
        $region46: #{tpu_custom_call.1} parent=43 // pred_check_branch
          %324 = sbr.rel (%p322) target = $region48
        $region47: #{tpu_custom_call.1} parent=43 // pred_region
          %s325 = sand.u32 %s97, 1
          %s326 = scalar_lea.sflag [#allocation4], %s325
          %s327 = sand.u32 %s97, 1
          %s328 = smul.addr %s327, 64
          %s329 = scalar_lea.vmem [#allocation5], %s328
          %330 = dma.done %s326, 1024
        $region48: #{tpu_custom_call.1} parent=43 // pred_fallthru
          _
      $region44: #{tpu_custom_call.1} parent=5 // pred_fallthru
        _
    $region6: #{tpu_custom_call.1} parent=1 // loop_footer
      %s19 = sadd.s32 1, %s15
    $region7: #{tpu_custom_call.1} parent=1 // loop_footer_branch
      %14 = sbr.rel target = $region3
    $region8: #{tpu_custom_call.1} parent=1 // loop_exit
      _
    %331 = vsyncpa [#allocation3], 1
    %s332 = scalar_lea.sflag [#allocation3], 1
    %333 = vsyncpa %s332, 1
    %334 = vsyncpa [#allocation4], 1
    %s335 = scalar_lea.sflag [#allocation4], 1
    %336 = vsyncpa %s335, 1

</llo_original>
